<compile_context>
chip_gen: v7x
topology: tpu7x:2x2x1
jax: 0.10.0
libtpu: 0.0.40
codegen_flags: <defaults>
</compile_context>

<pallas_src>
import functools

import jax
import jax.numpy as jnp
from jax.experimental import pallas as pl
from jax.experimental.pallas import tpu as pltpu

_LANE = 128
_VMEM_BUDGET_BYTES = 16 * 1024 * 1024  # double-buffered in+out tile budget (safe on v5e/v6e/v7x)


def _batchnorm_kernel(x_ref, gamma_ref, beta_ref, o_ref, *, eps, inv_n):
    # x_ref: (N, TF)   gamma_ref/beta_ref: (1, TF) f32   o_ref: (N, TF)
    x32 = x_ref[...].astype(jnp.float32)

    # One-pass per-feature stats in f32 (biased variance, clamped at 0).
    mean = jnp.sum(x32, axis=0, keepdims=True) * inv_n
    ex2 = jnp.sum(x32 * x32, axis=0, keepdims=True) * inv_n
    var = jnp.maximum(ex2 - mean * mean, 0.0)
    inv_std = jax.lax.rsqrt(var + eps)

    # Fold everything into a single per-element FMA: y = x * scale + shift.
    scale = inv_std * gamma_ref[...]
    shift = beta_ref[...] - mean * scale

    if o_ref.dtype == jnp.float32:
        o_ref[...] = x32 * scale + shift
    else:
        # Keep the elementwise normalize in the (narrow) input dtype; stats
        # above stay f32 for accuracy.
        nd = x_ref.dtype
        o_ref[...] = (x_ref[...] * scale.astype(nd) + shift.astype(nd)).astype(o_ref.dtype)


def batchnorm_pallas(x, gamma, beta, eps=1e-5):
    """BatchNorm1d forward (training-mode batch statistics).

    x: (B, S, F) or (N, F); gamma, beta: (F,)
    """
    orig_shape = x.shape
    if x.ndim == 3:
        b, s, f = x.shape
        x2d = x.reshape(b * s, f)
    elif x.ndim == 2:
        x2d = x
        f = x.shape[-1]
    else:
        raise ValueError("expected 2-D or 3-D input")

    n = x2d.shape[0]
    x_bytes = jnp.dtype(x2d.dtype).itemsize
    out_bytes = x_bytes

    # --- choose lane-dense feature tile TF ---------------------------------
    # Per feature column: 2x (double buffer) of input + output rows.
    per_col_bytes = 2 * n * (x_bytes + out_bytes)
    tf = (_VMEM_BUDGET_BYTES // max(per_col_bytes * _LANE, 1)) * _LANE
    f_pad = ((f + _LANE - 1) // _LANE) * _LANE          # lane-dense feature extent
    tf = max(_LANE, min(tf, f_pad))
    f_pad = ((f_pad + tf - 1) // tf) * tf               # make grid blocks exact

    # --- pad inputs to the lane-dense extent --------------------------------
    gamma_f32 = gamma.astype(jnp.float32)
    beta_f32 = beta.astype(jnp.float32)
    if f_pad != f:
        x2d = jnp.pad(x2d, ((0, 0), (0, f_pad - f)))
        gamma_f32 = jnp.pad(gamma_f32, (0, f_pad - f), constant_values=1.0)
        beta_f32 = jnp.pad(beta_f32, (0, f_pad - f))
    gamma2d = gamma_f32.reshape(1, f_pad)
    beta2d = beta_f32.reshape(1, f_pad)

    kernel = functools.partial(_batchnorm_kernel, eps=float(eps), inv_n=1.0 / n)

    out2d = pl.pallas_call(
        kernel,
        out_shape=jax.ShapeDtypeStruct((n, f_pad), x2d.dtype),
        grid=(f_pad // tf,),
        in_specs=[
            pl.BlockSpec((n, tf), lambda j: (0, j)),
            pl.BlockSpec((1, tf), lambda j: (0, j)),
            pl.BlockSpec((1, tf), lambda j: (0, j)),
        ],
        out_specs=pl.BlockSpec((n, tf), lambda j: (0, j)),
        compiler_params=pltpu.CompilerParams(
            dimension_semantics=("parallel",),
            vmem_limit_bytes=32 * 1024 * 1024,
        ),
    )(x2d, gamma2d, beta2d)

    if f_pad != f:
        out2d = out2d[:, :f]
    if len(orig_shape) == 3:
        return out2d.reshape(orig_shape)
    return out2d


def batchnorm_ref(x, gamma, beta, eps=1e-5):
    orig_shape = x.shape
    if x.ndim == 3:
        x = x.reshape(-1, x.shape[-1])
    x = x.astype(jnp.float32)
    mean = jnp.mean(x, axis=0, keepdims=True)
    var = jnp.mean((x - mean) ** 2, axis=0, keepdims=True)
    y = (x - mean) / jnp.sqrt(var + eps) * gamma.reshape(1, -1) + beta.reshape(1, -1)
    return y.reshape(orig_shape)


if __name__ == "__main__":
    key = jax.random.PRNGKey(0)
    B, S, F = 2, 8, 32  # batch, seq, num_features
    x = jax.random.normal(key, (B, S, F), dtype=jnp.float32)

    # Deterministic parameter init (PyTorch BatchNorm1d affine defaults)
    gamma = jnp.ones((F,), dtype=jnp.float32)   # weight
    beta = jnp.zeros((F,), dtype=jnp.float32)   # bias

    out = batchnorm_pallas(x, gamma, beta)
    out = jax.block_until_ready(out)

    ref = batchnorm_ref(x, gamma, beta)
    assert out.shape == (B, S, F)
    assert jnp.allclose(out, ref, atol=1e-5, rtol=1e-5), "mismatch vs reference"
    print("KERNEL_OK")
</pallas_src>

<mosaic_0001>
module attributes {stable_mosaic.version = 11 : i64} {
  func.func @_batchnorm_kernel(%arg0: i32, %arg1: memref<16x128xf32, #tpu.memory_space<vmem>>, %arg2: memref<1x128xf32, #tpu.memory_space<vmem>>, %arg3: memref<1x128xf32, #tpu.memory_space<vmem>>, %arg4: memref<16x128xf32, #tpu.memory_space<vmem>>) attributes {dimension_semantics = [#tpu.dimension_semantics<parallel>], iteration_bounds = array<i64: 1>, scalar_prefetch = 0 : i64, scratch_operands = 0 : i64, tpu.core_type = #tpu.core_type<tc>, window_params = [{transform_indices = @transform_0, window_bounds = array<i64: 16, 128>}, {transform_indices = @transform_1, window_bounds = array<i64: 1, 128>}, {transform_indices = @transform_2, window_bounds = array<i64: 1, 128>}, {transform_indices = @transform_3, window_bounds = array<i64: 16, 128>}]} {
    %c0 = arith.constant 0 : index
    %c0_0 = arith.constant 0 : index
    %0 = vector.load %arg1[%c0, %c0_0] : memref<16x128xf32, #tpu.memory_space<vmem>>, vector<16x128xf32>
    %cst = arith.constant dense<0.000000e+00> : vector<128xf32>
    %1 = vector.multi_reduction <add>, %0, %cst [0] : vector<16x128xf32> to vector<128xf32>
    %2 = vector.shape_cast %1 : vector<128xf32> to vector<1x128xf32>
    %cst_1 = arith.constant 6.250000e-02 : f32
    %3 = vector.broadcast %cst_1 : f32 to vector<1x128xf32>
    %4 = arith.mulf %2, %3 : vector<1x128xf32>
    %5 = arith.mulf %0, %0 : vector<16x128xf32>
    %cst_2 = arith.constant dense<0.000000e+00> : vector<128xf32>
    %6 = vector.multi_reduction <add>, %5, %cst_2 [0] : vector<16x128xf32> to vector<128xf32>
    %7 = vector.shape_cast %6 : vector<128xf32> to vector<1x128xf32>
    %cst_3 = arith.constant 6.250000e-02 : f32
    %8 = vector.broadcast %cst_3 : f32 to vector<1x128xf32>
    %9 = arith.mulf %7, %8 : vector<1x128xf32>
    %10 = arith.mulf %4, %4 : vector<1x128xf32>
    %11 = arith.subf %9, %10 : vector<1x128xf32>
    %cst_4 = arith.constant 0.000000e+00 : f32
    %12 = vector.broadcast %cst_4 : f32 to vector<1x128xf32>
    %13 = arith.maximumf %11, %12 : vector<1x128xf32>
    %cst_5 = arith.constant 9.99999974E-6 : f32
    %14 = vector.broadcast %cst_5 : f32 to vector<1x128xf32>
    %15 = arith.addf %13, %14 : vector<1x128xf32>
    %16 = math.rsqrt %15 : vector<1x128xf32>
    %c0_6 = arith.constant 0 : index
    %c0_7 = arith.constant 0 : index
    %17 = vector.load %arg2[%c0_6, %c0_7] : memref<1x128xf32, #tpu.memory_space<vmem>>, vector<1x128xf32>
    %18 = arith.mulf %16, %17 : vector<1x128xf32>
    %c0_8 = arith.constant 0 : index
    %c0_9 = arith.constant 0 : index
    %19 = vector.load %arg3[%c0_8, %c0_9] : memref<1x128xf32, #tpu.memory_space<vmem>>, vector<1x128xf32>
    %20 = arith.mulf %4, %18 : vector<1x128xf32>
    %21 = arith.subf %19, %20 : vector<1x128xf32>
    %22 = vector.broadcast %18 : vector<1x128xf32> to vector<16x128xf32>
    %23 = arith.mulf %0, %22 : vector<16x128xf32>
    %24 = vector.broadcast %21 : vector<1x128xf32> to vector<16x128xf32>
    %25 = arith.addf %23, %24 : vector<16x128xf32>
    %c0_10 = arith.constant 0 : index
    %c0_11 = arith.constant 0 : index
    %26 = vector.load %arg4[%c0_10, %c0_11] : memref<16x128xf32, #tpu.memory_space<vmem>>, vector<16x128xf32>
    tpu.vector_store %arg4[%c0_10, %c0_11], %25 {strides = array<i32>} : memref<16x128xf32, #tpu.memory_space<vmem>>, vector<16x128xf32>,
    return
  }
  func.func @transform_0(%arg0: i32) -> (i32, i32) {
    %c0_i32 = arith.constant 0 : i32
    %c0_i32_0 = arith.constant 0 : i32
    return %c0_i32, %arg0 : i32, i32
  }
  func.func @transform_1(%arg0: i32) -> (i32, i32) {
    %c0_i32 = arith.constant 0 : i32
    %c0_i32_0 = arith.constant 0 : i32
    return %c0_i32, %arg0 : i32, i32
  }
  func.func @transform_2(%arg0: i32) -> (i32, i32) {
    %c0_i32 = arith.constant 0 : i32
    %c0_i32_0 = arith.constant 0 : i32
    return %c0_i32, %arg0 : i32, i32
  }
  func.func @transform_3(%arg0: i32) -> (i32, i32) {
    %c0_i32 = arith.constant 0 : i32
    %c0_i32_0 = arith.constant 0 : i32
    return %c0_i32, %arg0 : i32, i32
  }
}

</mosaic_0001>

<llo_original>
// kernel: tpu_custom_call.1
$region0: #{tpu_custom_call.1}
  #allocation0 [shape = 'u32[]', space=smem, size = 0x4, offset = 0x4, fixed_abs, tag = 'smem constant byte address 0x4 - core index']
  #allocation1 [shape = 'u32[144,128]{1,0:T(1,128)}', space=vmem, size = 0x12000, scoped, tag = 'internal scratch']
  %s0 = inlined_call_operand.hbm [shape: f32[16,128], index: 0, kind: input, shape index: {}]
  %s1 = inlined_call_operand.vmem [shape: f32[1,128], index: 1, kind: input, shape index: {}]
  %s2 = inlined_call_operand.vmem [shape: f32[1,128], index: 2, kind: input, shape index: {}]
  %s3 = inlined_call_operand.hbm [shape: f32[16,128], index: 3, kind: output, shape index: {}]
  %s4 = sld [smem:[#allocation0]]
  $region26: #{tpu_custom_call.1} parent=0
    _
  %s6 = ssub.s32 1, %s4
  %s7 = scalar_select 0, %s6, %s4
  $region1: #{tpu_custom_call.1} parent=0
    #allocation2 [shape = 'u8[8192]{0}', space=vmem, size = 0x2000, scoped, tag = 'input window, operand 0, single buffered']
    #allocation3 [shape = 's32[1]{0}', space=sflag, size = 0x4, scoped, tag = 'scoped memory for tpu_custom_call.1']
    #allocation4 [shape = 's32[1]{0}', space=sflag, size = 0x4, scoped, tag = 'scoped memory for tpu_custom_call.1']
    #allocation5 [shape = 'u8[8192]{0}', space=vmem, size = 0x2000, scoped, tag = 'output window, operand 0, single buffered']
    %8 = vsyncpa [#allocation3], 0
    %9 = vsyncpa [#allocation4], 0
    // Predicated region
    $region2: #{tpu_custom_call.1} parent=1 // pred_check
      _
    $region3: #{tpu_custom_call.1} parent=1 // pred_check_branch
      %11 = sbr.rel (0) target = $region5
    $region4: #{tpu_custom_call.1} parent=1 // pred_region
      %s13 = ssub.s32 256, 256
      %14 = vsyncadd [#allocation3], %s13
      %s15 = sshll.u32 [#allocation2], 4
      %s16 = int_to_ptr.vmem [resolvable:$true] %s15
      %21 = dma.hbm_to_vmem [thread:$0]  %s0, 256, %s16, [#allocation3], 128, 128, 8
    $region5: #{tpu_custom_call.1} parent=1 // pred_fallthru
      _
    // Predicated region
    $region6: #{tpu_custom_call.1} parent=1 // pred_check
      _
    $region7: #{tpu_custom_call.1} parent=1 // pred_check_branch
      %23 = sbr.rel (0) target = $region9
    $region8: #{tpu_custom_call.1} parent=1 // pred_region
      _
    $region9: #{tpu_custom_call.1} parent=1 // pred_fallthru
      _
    // Predicated region
    $region10: #{tpu_custom_call.1} parent=1 // pred_check
      _
    $region11: #{tpu_custom_call.1} parent=1 // pred_check_branch
      %25 = sbr.rel (0) target = $region13
    $region12: #{tpu_custom_call.1} parent=1 // pred_region
      _
    $region13: #{tpu_custom_call.1} parent=1 // pred_fallthru
      _
    // Predicated region
    $region14: #{tpu_custom_call.1} parent=1 // pred_check
      _
    $region15: #{tpu_custom_call.1} parent=1 // pred_check_branch
      %27 = sbr.rel (0) target = $region17
    $region16: #{tpu_custom_call.1} parent=1 // pred_region
      %28 = dma.done [#allocation3], 256
    $region17: #{tpu_custom_call.1} parent=1 // pred_fallthru
      _
    %v29 = vld [vmem:[#allocation2] sm:$0xff]
    %v30 = vld [vmem:[#allocation2 + $0x8] sm:$0xff]
    %v31 = vadd.f32 %v29, %v30
    %v32 = vrot.slane %v31, 4
    %v33 = vadd.f32 %v31, %v32
    %v34 = vrot.slane %v33, 2
    %v35 = vadd.f32 %v33, %v34
    %v36 = vrot.slane %v35, 1
    %v37 = vadd.f32 %v35, %v36
    %v38 = vmul.f32 %v37, 0.0625
    %v39 = vmul.f32 %v29, %v29
    %v40 = vmul.f32 %v30, %v30
    %v41 = vadd.f32 %v39, %v40
    %v42 = vrot.slane %v41, 4
    %v43 = vadd.f32 %v41, %v42
    %v44 = vrot.slane %v43, 2
    %v45 = vadd.f32 %v43, %v44
    %v46 = vrot.slane %v45, 1
    %v47 = vadd.f32 %v45, %v46
    %v48 = vmul.f32 %v47, 0.0625
    %v49 = vmul.f32 %v38, %v38
    %v50 = vsub.f32 %v48, %v49
    %v51 = vmax.f32 %v50, 0.0
    %v52 = vadd.f32 %v51, 1e-05
    %v53 = vrsqrt.pop %v52
    %v54 = vld [vmem:[%s1] sm:$0x1]
    %v55 = vmul.f32 %v53, %v54
    %v56 = vld [vmem:[%s2] sm:$0x1]
    %v57 = vmul.f32 %v38, %v55
    %v58 = vsub.f32 %v56, %v57
    %v59 = vlaneseq
    %v60 = vshrl.u32 %v59, 7
    %v61 = vsub.s32 0, %v60
    %v62 = vrot.slane %v55, %v61
    %v63 = vmul.f32 %v29, %v62
    %v64 = vmul.f32 %v30, %v62
    %v66 = vlaneseq
    %v67 = vshrl.u32 %v66, 7
    %v68 = vsub.s32 0, %v67
    %v69 = vrot.slane %v58, %v68
    %v71 = vadd.f32 %v63, %v69
    %v72 = vadd.f32 %v64, %v69
    %73 = vst [vmem:[#allocation5] sm:$0xff] %v71
    %74 = vst [vmem:[#allocation5 + $0x8] sm:$0xff] %v72
    // Predicated region
    $region18: #{tpu_custom_call.1} parent=1 // pred_check
      _
    $region19: #{tpu_custom_call.1} parent=1 // pred_check_branch
      %76 = sbr.rel (0) target = $region21
    $region20: #{tpu_custom_call.1} parent=1 // pred_region
      %s78 = ssub.s32 256, 256
      %79 = vsyncadd [#allocation4], %s78
      %s80 = sshll.u32 [#allocation5], 4
      %s81 = int_to_ptr.vmem [resolvable:$true] %s80
      %86 = dma.vmem_to_hbm [thread:$0]  %s81, 256, %s3, [#allocation4], 128, 128, 8
    $region21: #{tpu_custom_call.1} parent=1 // pred_fallthru
      _
    // Predicated region
    $region22: #{tpu_custom_call.1} parent=1 // pred_check
      _
    $region23: #{tpu_custom_call.1} parent=1 // pred_check_branch
      %88 = sbr.rel (0) target = $region25
    $region24: #{tpu_custom_call.1} parent=1 // pred_region
      %89 = dma.done [#allocation4], 256
    $region25: #{tpu_custom_call.1} parent=1 // pred_fallthru
      _
    %90 = vsyncpa [#allocation3], 1
    %91 = vsyncpa [#allocation4], 1

</llo_original>
